<compile_context>
chip_gen: v6e
topology: v6e:2x2x1
jax: 0.10.0
libtpu: 0.0.40
codegen_flags: <defaults>
</compile_context>

<pallas_src>
import functools
import math

import jax
import jax.numpy as jnp
from jax import lax
from jax.experimental import pallas as pl
from jax.experimental.pallas import tpu as pltpu

ALPHA = 0.9
MAX_ITER = float("inf")          # same default as the PyTorch module
_BLOCK_ELEMS = 1024 * 1024       # ~4 MiB per f32 block per array
_VMEM_LIMIT_BYTES = 48 << 20     # explicit scoped-VMEM budget for the pipeline


# ----------------------------- kernels --------------------------------------

def _ema_train_inf_kernel(inv_corr_ref, x_ref, ema_ref, ema_out_ref, unb_out_ref,
                          *, alpha):
    """max_iter == inf specialization: update always runs, unb is write-only."""
    inv_corr = inv_corr_ref[0]                    # SMEM: 1 / (1 - alpha**new_iter)
    x = x_ref[...].astype(jnp.float32)            # cast in-register (x may be bf16)
    new_ema = ema_ref[...] * alpha + x * (1.0 - alpha)
    ema_out_ref[...] = new_ema
    unb_out_ref[...] = new_ema * inv_corr


def _ema_train_kernel(flag_ref, inv_corr_ref, x_ref, ema_ref, unb_ref,
                      ema_out_ref, unb_out_ref, *, alpha):
    """Generic (finite max_iter) training kernel."""
    do_update = flag_ref[0] != 0                  # SMEM scalar: iter <= max_iter
    inv_corr = inv_corr_ref[0]                    # SMEM scalar (1.0 if no update)
    x = x_ref[...].astype(jnp.float32)
    ema = ema_ref[...]
    unb = unb_ref[...]
    # if isnan(ema_unbiased): ema_unbiased = x   (relevant when update is skipped)
    unb_fixed = jnp.where(jnp.isnan(unb), x, unb)
    updated_ema = ema * alpha + x * (1.0 - alpha)
    new_ema = jnp.where(do_update, updated_ema, ema)
    new_unb = jnp.where(do_update, new_ema * inv_corr, unb_fixed)
    ema_out_ref[...] = new_ema
    unb_out_ref[...] = new_unb


def _ema_eval_kernel(x_ref, unb_ref, unb_out_ref):
    # eval mode only performs the NaN->x seeding; ema / iter are untouched.
    x = x_ref[...].astype(jnp.float32)
    unb = unb_ref[...]
    unb_out_ref[...] = jnp.where(jnp.isnan(unb), x, unb)


# ----------------------------- state helpers ---------------------------------

def _layout(n):
    lanes = 512 if n % 512 == 0 else 128
    rows = pl.cdiv(n, lanes)
    return rows, lanes


def init_ema_state(shape):
    """Returns (ema, ema_unbiased, iter, seeded) mirroring the PyTorch buffers.

    ema / ema_unbiased live persistently in the kernel's lane-dense
    (rows, lanes) f32 layout so every step is a true in-place update."""
    n = math.prod(shape)
    rows, lanes = _layout(n)
    ema = jnp.zeros((rows, lanes), jnp.float32)                    # tensor(0.0)
    ema_unbiased = jnp.full((rows, lanes), jnp.nan, jnp.float32)   # tensor(nan)
    it = jnp.zeros((1,), jnp.int32)                                # self.iter = 0
    seeded = jnp.zeros((1,), jnp.int32)                            # unb still NaN
    return ema, ema_unbiased, it, seeded


def ema_value(ema_unbiased_state, shape):
    """View the stored ema_unbiased state as `shape` (the forward's output)."""
    n = math.prod(shape)
    flat = ema_unbiased_state.reshape(-1)
    if flat.size != n:
        flat = flat[:n]
    return flat.reshape(shape)


# ----------------------------- forward ---------------------------------------

@functools.partial(jax.jit,
                   static_argnames=("training", "alpha", "max_iter"),
                   donate_argnums=(1, 2, 3, 4))
def _ema_forward(x, ema, ema_unbiased, it, seeded, *,
                 training=True, alpha=ALPHA, max_iter=MAX_ITER):
    """One EMA.forward() step on persistent (rows, lanes) state.

    Returns (new_ema, new_ema_unbiased, new_iter, new_seeded); the module's
    forward output is new_ema_unbiased (see ema_value())."""
    rows, lanes = ema.shape
    n = x.size
    pad = rows * lanes - n

    # x is the only array that may need padding into the lane-dense layout.
    # TODO(synk): handle the ragged tail with a masked final block instead of
    # this one extra pad pass over x when n % lanes != 0.
    x_flat = x.reshape(-1)
    if pad:
        x_flat = jnp.pad(x_flat, (0, pad))
    x2 = x_flat.reshape(rows, lanes)

    cap = max(8, _BLOCK_ELEMS // lanes)
    tile_rows = rows if rows <= cap else cap
    grid = (pl.cdiv(rows, tile_rows),)

    vspec = pl.BlockSpec((tile_rows, lanes), lambda i: (i, 0))
    sspec = pl.BlockSpec(memory_space=pltpu.SMEM)
    cparams = pltpu.CompilerParams(
        dimension_semantics=("parallel",),        # v7x: both TCs split this axis
        vmem_limit_bytes=_VMEM_LIMIT_BYTES)
    fshape = jax.ShapeDtypeStruct((rows, lanes), jnp.float32)

    if training and math.isinf(max_iter):
        # Default config: the update always happens -> the unb READ is dead.
        new_it = it + 1
        t = new_it[0].astype(jnp.float32)
        inv_corr = jnp.reshape(
            1.0 / (1.0 - jnp.power(jnp.float32(alpha), t)), (1,)).astype(jnp.float32)

        kernel = functools.partial(_ema_train_inf_kernel, alpha=float(alpha))
        new_ema, new_unb = pl.pallas_call(
            kernel,
            grid=grid,
            out_shape=(fshape, fshape),
            in_specs=[sspec, vspec, vspec],
            out_specs=(vspec, vspec),
            input_output_aliases={2: 0},          # ema -> ema_out (in place)
            compiler_params=cparams,
        )(inv_corr, x2, ema)
    elif training:
        # Finite max_iter: generic kernel; compare iter in INTEGER (no f32 cast).
        limit = jnp.int32(int(min(max_iter, 2**31 - 2)))
        do_update = it[0] <= limit
        new_it = jnp.where(do_update, it + 1, it)
        t = new_it[0].astype(jnp.float32)
        corr = 1.0 - jnp.power(jnp.float32(alpha), t)
        # Guard against inf when the update is skipped (value is discarded then).
        inv_corr = jnp.reshape(
            jnp.where(do_update, 1.0 / corr, jnp.float32(1.0)), (1,)
        ).astype(jnp.float32)
        flag = jnp.reshape(do_update.astype(jnp.int32), (1,))

        kernel = functools.partial(_ema_train_kernel, alpha=float(alpha))
        new_ema, new_unb = pl.pallas_call(
            kernel,
            grid=grid,
            out_shape=(fshape, fshape),
            in_specs=[sspec, sspec, vspec, vspec, vspec],
            out_specs=(vspec, vspec),
            input_output_aliases={3: 0, 4: 1},    # ema -> ema_out, unb -> unb_out
            compiler_params=cparams,
        )(flag, inv_corr, x2, ema, ema_unbiased)
    else:
        # Eval: only the one-time NaN->x seeding can do work.  Once seeded, skip
        # the kernel launch entirely (saves three full-tensor HBM passes/call).
        def _seed(ops):
            x2_, unb_ = ops
            return pl.pallas_call(
                _ema_eval_kernel,
                grid=grid,
                out_shape=fshape,
                in_specs=[vspec, vspec],
                out_specs=vspec,
                compiler_params=cparams,
            )(x2_, unb_)

        new_unb = lax.cond(seeded[0] == 0, _seed, lambda ops: ops[1],
                           (x2, ema_unbiased))
        new_ema = ema
        new_it = it

    new_seeded = jnp.ones_like(seeded)
    return new_ema, new_unb, new_it, new_seeded


def ema_forward(inp, ema, ema_unbiased, it, seeded, *, training=True,
                alpha=ALPHA, max_iter=MAX_ITER):
    """Mirror of EMA.forward: accepts a tensor or a callable producing one."""
    x = inp() if callable(inp) else inp
    return _ema_forward(x, ema, ema_unbiased, it, seeded,
                        training=training, alpha=alpha, max_iter=max_iter)


# ----------------------------- reference & test ------------------------------

def _reference_forward(x, ema, unb, it, alpha=ALPHA, training=True,
                       max_iter=MAX_ITER):
    """Pure-JAX reference mirroring the PyTorch module (elementwise state)."""
    unb = jnp.where(jnp.isnan(unb), x, unb)
    if (not training) or (int(it[0]) > max_iter):
        return unb, ema, unb, it
    ema = ema * alpha + x * (1 - alpha)
    it = it + 1
    unb = ema / (1 - alpha ** int(it[0]))
    return unb, ema, unb, it


if __name__ == "__main__":
    B, C, H, W = 2, 4, 16, 16
    x_shape = (B, C, H, W)
    key = jax.random.PRNGKey(0)

    ema, unb, it, seeded = init_ema_state(x_shape)
    # independent reference state (kernel-side state buffers are donated)
    r_ema = jnp.zeros(x_shape, jnp.float32)
    r_unb = jnp.full(x_shape, jnp.nan, jnp.float32)
    r_it = jnp.zeros((1,), jnp.int32)

    ok = True
    for step in range(3):
        key, sub = jax.random.split(key)
        x = jax.random.normal(sub, x_shape, jnp.float32)

        ema, unb, it, seeded = ema_forward(x, ema, unb, it, seeded, training=True)
        out = jax.block_until_ready(ema_value(unb, x_shape))   # forward output

        r_out, r_ema, r_unb, r_it = _reference_forward(x, r_ema, r_unb, r_it,
                                                       training=True)
        ok &= bool(jnp.allclose(out, r_out, atol=1e-5, rtol=1e-5))
        ok &= bool(jnp.allclose(ema_value(ema, x_shape), r_ema,
                                atol=1e-5, rtol=1e-5))
        ok &= int(it[0]) == int(r_it[0])

    # eval-mode call on a seeded state: returns stored ema_unbiased untouched,
    # no EMA/iter update (kernel launch skipped via the seeded gate).
    unb_before = jax.device_get(ema_value(unb, x_shape))
    it_before = int(it[0])
    key, sub = jax.random.split(key)
    x = jax.random.normal(sub, x_shape, jnp.float32)
    ema, unb, it, seeded = ema_forward(x, ema, unb, it, seeded, training=False)
    out_eval = jax.block_until_ready(ema_value(unb, x_shape))
    ok &= bool(jnp.allclose(out_eval, unb_before, atol=1e-5, rtol=1e-5))
    ok &= int(it[0]) == it_before

    # eval-mode call on a FRESH state: NaN buffer is seeded with x (one-time path).
    e2, u2, i2, s2 = init_ema_state(x_shape)
    key, sub = jax.random.split(key)
    x2 = jax.random.normal(sub, x_shape, jnp.float32)
    e2, u2, i2, s2 = ema_forward(x2, e2, u2, i2, s2, training=False)
    out_seed = jax.block_until_ready(ema_value(u2, x_shape))
    ok &= bool(jnp.allclose(out_seed, x2, atol=1e-5, rtol=1e-5))

    print("KERNEL_OK" if ok else "MISMATCH")
</pallas_src>

<mosaic_0001>
module attributes {stable_mosaic.version = 11 : i64} {
  func.func @_ema_train_inf_kernel(%arg0: i32, %arg1: memref<1xf32, #tpu.memory_space<smem>>, %arg2: memref<4x512xf32, #tpu.memory_space<vmem>>, %arg3: memref<4x512xf32, #tpu.memory_space<vmem>>, %arg4: memref<4x512xf32, #tpu.memory_space<vmem>>, %arg5: memref<4x512xf32, #tpu.memory_space<vmem>>) attributes {dimension_semantics = [#tpu.dimension_semantics<parallel>], iteration_bounds = array<i64: 1>, scalar_prefetch = 0 : i64, scratch_operands = 0 : i64, tpu.core_type = #tpu.core_type<tc>, window_params = [{transform_indices = @transform_0, window_bounds = array<i64: 1>}, {transform_indices = @transform_1, window_bounds = array<i64: 4, 512>}, {transform_indices = @transform_2, window_bounds = array<i64: 4, 512>}, {transform_indices = @transform_3, window_bounds = array<i64: 4, 512>}, {transform_indices = @transform_4, window_bounds = array<i64: 4, 512>}]} {
    %c0 = arith.constant 0 : index
    %0 = memref.load %arg1[%c0] : memref<1xf32, #tpu.memory_space<smem>>
    %c0_0 = arith.constant 0 : index
    %c0_1 = arith.constant 0 : index
    %1 = vector.load %arg2[%c0_0, %c0_1] : memref<4x512xf32, #tpu.memory_space<vmem>>, vector<4x512xf32>
    %c0_2 = arith.constant 0 : index
    %c0_3 = arith.constant 0 : index
    %2 = vector.load %arg3[%c0_2, %c0_3] : memref<4x512xf32, #tpu.memory_space<vmem>>, vector<4x512xf32>
    %cst = arith.constant 0.899999976 : f32
    %3 = vector.broadcast %cst : f32 to vector<4x512xf32>
    %4 = arith.mulf %2, %3 : vector<4x512xf32>
    %cst_4 = arith.constant 1.000000e-01 : f32
    %5 = vector.broadcast %cst_4 : f32 to vector<4x512xf32>
    %6 = arith.mulf %1, %5 : vector<4x512xf32>
    %7 = arith.addf %4, %6 : vector<4x512xf32>
    %c0_5 = arith.constant 0 : index
    %c0_6 = arith.constant 0 : index
    %8 = vector.load %arg4[%c0_5, %c0_6] : memref<4x512xf32, #tpu.memory_space<vmem>>, vector<4x512xf32>
    tpu.vector_store %arg4[%c0_5, %c0_6], %7 {strides = array<i32>} : memref<4x512xf32, #tpu.memory_space<vmem>>, vector<4x512xf32>,
    %9 = vector.broadcast %0 : f32 to vector<4x512xf32>
    %10 = arith.mulf %7, %9 : vector<4x512xf32>
    %c0_7 = arith.constant 0 : index
    %c0_8 = arith.constant 0 : index
    %11 = vector.load %arg5[%c0_7, %c0_8] : memref<4x512xf32, #tpu.memory_space<vmem>>, vector<4x512xf32>
    tpu.vector_store %arg5[%c0_7, %c0_8], %10 {strides = array<i32>} : memref<4x512xf32, #tpu.memory_space<vmem>>, vector<4x512xf32>,
    return
  }
  func.func @transform_0(%arg0: i32) -> i32 {
    %c0_i32 = arith.constant 0 : i32
    %c0_i32_0 = arith.constant 0 : i32
    return %c0_i32 : i32
  }
  func.func @transform_1(%arg0: i32) -> (i32, i32) {
    %c0_i32 = arith.constant 0 : i32
    %c0_i32_0 = arith.constant 0 : i32
    return %arg0, %c0_i32 : i32, i32
  }
  func.func @transform_2(%arg0: i32) -> (i32, i32) {
    %c0_i32 = arith.constant 0 : i32
    %c0_i32_0 = arith.constant 0 : i32
    return %arg0, %c0_i32 : i32, i32
  }
  func.func @transform_3(%arg0: i32) -> (i32, i32) {
    %c0_i32 = arith.constant 0 : i32
    %c0_i32_0 = arith.constant 0 : i32
    return %arg0, %c0_i32 : i32, i32
  }
  func.func @transform_4(%arg0: i32) -> (i32, i32) {
    %c0_i32 = arith.constant 0 : i32
    %c0_i32_0 = arith.constant 0 : i32
    return %arg0, %c0_i32 : i32, i32
  }
}

</mosaic_0001>

<llo_original>
// kernel: _ema_forward.1
$region0: #{_ema_forward.1}
  #allocation0 [shape = 'u32[]', space=smem, size = 0x4, offset = 0x4, fixed_abs, tag = 'smem constant byte address 0x4 - core index']
  #allocation1 [shape = 'u32[144,128]{1,0:T(1,128)}', space=vmem, size = 0x12000, scoped, tag = 'internal scratch']
  #allocation2 [shape = 'f32[1]{0:T(128)S(6)}', space=smem, size = 0x200, scoped, tag = 'scoped memory for _ema_forward.1']
  %s0 = inlined_call_operand.<no memory space> [shape: f32[1], index: 0, kind: input, shape index: {}]
  %s1 = inlined_call_operand.vmem [shape: f32[4,512], index: 1, kind: input, shape index: {}]
  %s2 = inlined_call_operand.vmem [shape: f32[4,512], index: 2, kind: input, shape index: {}, may-alias: {2,3}]
  %s3 = inlined_call_operand.vmem [shape: f32[4,512], index: 3, kind: output, shape index: {0}, may-alias: {2,3}]
  %s4 = inlined_call_operand.hbm [shape: f32[4,512], index: 4, kind: output, shape index: {1}]
  %5 = xla_tuple %s3, %s4
  %s6 = sld [smem:[#allocation0]]
  $region30: #{_ema_forward.1} parent=0
    _
  %s8 = ssub.s32 1, %s6
  %s9 = scalar_select 0, %s8, %s6
  %10 = sst [smem:[#allocation2]] %s0
  $region1: #{_ema_forward.1} parent=0
    #allocation3 [shape = 'u8[8192]{0}', space=vmem, size = 0x2000, scoped, tag = 'output window, operand 1, single buffered']
    #allocation4 [shape = 's32[1]{0}', space=sflag, size = 0x4, scoped, tag = 'scoped memory for _ema_forward.1']
    %11 = vsyncpa [#allocation4], 0
    // Predicated region
    $region2: #{_ema_forward.1} parent=1 // pred_check
      _
    $region3: #{_ema_forward.1} parent=1 // pred_check_branch
      %13 = sbr.rel (0) target = $region5
    $region4: #{_ema_forward.1} parent=1 // pred_region
      _
    $region5: #{_ema_forward.1} parent=1 // pred_fallthru
      _
    // Predicated region
    $region6: #{_ema_forward.1} parent=1 // pred_check
      _
    $region7: #{_ema_forward.1} parent=1 // pred_check_branch
      %15 = sbr.rel (0) target = $region9
    $region8: #{_ema_forward.1} parent=1 // pred_region
      _
    $region9: #{_ema_forward.1} parent=1 // pred_fallthru
      _
    // Predicated region
    $region10: #{_ema_forward.1} parent=1 // pred_check
      _
    $region11: #{_ema_forward.1} parent=1 // pred_check_branch
      %17 = sbr.rel (0) target = $region13
    $region12: #{_ema_forward.1} parent=1 // pred_region
      _
    $region13: #{_ema_forward.1} parent=1 // pred_fallthru
      _
    %s18 = sld [smem:[#allocation2]]
    %v19 = vld [vmem:[%s1] sm:$0xff]
    %v20 = vld [vmem:[%s1 + $0x8] sm:$0xff]
    %v21 = vld [vmem:[%s2] sm:$0xff]
    %v22 = vld [vmem:[%s2 + $0x8] sm:$0xff]
    %v23 = vmul.f32 %v21, 0.9
    %v24 = vmul.f32 %v22, 0.9
    %v25 = vmul.f32 %v19, 0.1
    %v26 = vmul.f32 %v20, 0.1
    %v27 = vadd.f32 %v23, %v25
    %v28 = vadd.f32 %v24, %v26
    %29 = vst [vmem:[%s3] sm:$0xff] %v27
    %30 = vst [vmem:[%s3 + $0x8] sm:$0xff] %v28
    %v31 = vstv %s18
    %v32 = vmul.f32 %v27, %v31
    %v33 = vmul.f32 %v28, %v31
    %34 = vst [vmem:[#allocation3] sm:$0xff] %v32
    %35 = vst [vmem:[#allocation3 + $0x8] sm:$0xff] %v33
    // Predicated region
    $region14: #{_ema_forward.1} parent=1 // pred_check
      _
    $region15: #{_ema_forward.1} parent=1 // pred_check_branch
      %37 = sbr.rel (0) target = $region17
    $region16: #{_ema_forward.1} parent=1 // pred_region
      _
    $region17: #{_ema_forward.1} parent=1 // pred_fallthru
      _
    // Predicated region
    $region18: #{_ema_forward.1} parent=1 // pred_check
      _
    $region19: #{_ema_forward.1} parent=1 // pred_check_branch
      %39 = sbr.rel (0) target = $region21
    $region20: #{_ema_forward.1} parent=1 // pred_region
      %s41 = ssub.s32 256, 256
      %42 = vsyncadd [#allocation4], %s41
      %s44 = sshll.u32 [#allocation3], 4
      %s45 = int_to_ptr.vmem [resolvable:$true] %s44
      %47 = dma.vmem_to_hbm [thread:$0]  %s45, 256, %s4, [#allocation4]
    $region21: #{_ema_forward.1} parent=1 // pred_fallthru
      _
    // Predicated region
    $region22: #{_ema_forward.1} parent=1 // pred_check
      _
    $region23: #{_ema_forward.1} parent=1 // pred_check_branch
      %49 = sbr.rel (0) target = $region25
    $region24: #{_ema_forward.1} parent=1 // pred_region
      _
    $region25: #{_ema_forward.1} parent=1 // pred_fallthru
      _
    // Predicated region
    $region26: #{_ema_forward.1} parent=1 // pred_check
      _
    $region27: #{_ema_forward.1} parent=1 // pred_check_branch
      %51 = sbr.rel (0) target = $region29
    $region28: #{_ema_forward.1} parent=1 // pred_region
      %52 = dma.done [#allocation4], 256
    $region29: #{_ema_forward.1} parent=1 // pred_fallthru
      _
    %53 = vsyncpa [#allocation4], 1

</llo_original>
